<compile_context>
chip_gen: v5e
topology: v5e:2x2
jax: 0.10.0
libtpu: 0.0.40
codegen_flags: <defaults>
</compile_context>

<pallas_src>
import functools

import jax
import jax.numpy as jnp
from jax.experimental import pallas as pl
from jax.experimental.pallas import tpu as pltpu


def _conv_kernel(x_ref, w_ref, b_ref, o_ref):
    """One batch-tile per grid step.

    x_ref: (TB, L + K - 1, C_in)   seq-padded input rows
    w_ref: (K, C_in, C_out_p)      conv weight, lane-padded output channels
    b_ref: (1, C_out_p)            bias (lane-padded)
    o_ref: (TB, L, C_out_p)        output rows (lane-dense)
    """
    TB, L, _ = o_ref.shape
    K = w_ref.shape[0]

    bias = b_ref[...].astype(jnp.float32)            # (1, C_out_p)
    w_taps = [w_ref[k] for k in range(K)]            # hoisted weight loads

    for b in range(TB):                               # static unroll over tile
        xb = x_ref[b]                                  # (L + K - 1, C_in)
        acc = jnp.dot(xb[0:L, :], w_taps[0],
                      preferred_element_type=jnp.float32)
        for k in range(1, K):
            acc = acc + jnp.dot(xb[k:k + L, :], w_taps[k],
                                preferred_element_type=jnp.float32)
        o_ref[b] = (acc + bias).astype(o_ref.dtype)


def conv_forward(x, weight, bias, *, pad_type="left", target_rows=256,
                 vmem_block_budget=8 * 1024 * 1024):
    """Equivalent of the PyTorch Conv module's forward.

    x:      [B, L, C_in]
    weight: [C_out, C_in, K]   (torch Conv1d layout)
    bias:   [C_out]
    returns [B, L, C_out]
    """
    B, L, C_in = x.shape
    C_out, _, K = weight.shape

    # ---- padding along the sequence axis (matches nn.ConstantPad1d) ----
    if pad_type == "left":
        pad_l, pad_r = K - 1, 0
    else:  # 'both': (K // 2, (K - 1) // 2), exactly as in the torch module
        pad_l, pad_r = K // 2, (K - 1) // 2
    x_pad = jnp.pad(x, ((0, 0), (pad_l, pad_r), (0, 0)))
    L_pad = L + K - 1

    # ---- weight: [C_out, C_in, K] -> [K, C_in, C_out]; lane-pad C_out ----
    C_out_p = ((C_out + 127) // 128) * 128
    w_kco = jnp.transpose(weight, (2, 1, 0))
    if C_out_p != C_out:
        w_kco = jnp.pad(w_kco, ((0, 0), (0, 0), (0, C_out_p - C_out)))
        b_row = jnp.pad(bias, (0, C_out_p - C_out)).reshape(1, C_out_p)
    else:
        b_row = bias.reshape(1, C_out_p)

    # ---- batch tile: amortize per-step overhead, cap by VMEM budget ----
    itemsize = jnp.dtype(x.dtype).itemsize
    tb = max(1, min(B, -(-target_rows // L)))                 # ceil(256 / L)
    per_b_bytes = (L_pad * C_in + L * C_out_p) * itemsize * 2  # double-buffered
    tb = int(max(1, min(tb, max(1, vmem_block_budget // max(per_b_bytes, 1)))))
    # TODO(synk): tile the sequence axis (with a K-1 halo via manual DMA) if a
    # single batch element's L_pad*C_in block no longer fits the VMEM budget.
    B_pad = pl.cdiv(B, tb) * tb
    if B_pad != B:
        x_pad = jnp.pad(x_pad, ((0, B_pad - B), (0, 0), (0, 0)))

    cost = pl.CostEstimate(
        flops=2 * B_pad * L * K * C_in * C_out_p,
        transcendentals=0,
        bytes_accessed=(B_pad * L_pad * C_in + K * C_in * C_out_p + C_out_p
                        + B_pad * L * C_out_p) * itemsize,
    )

    out = pl.pallas_call(
        _conv_kernel,
        out_shape=jax.ShapeDtypeStruct((B_pad, L, C_out_p), x.dtype),
        grid=(B_pad // tb,),
        in_specs=[
            pl.BlockSpec((tb, L_pad, C_in), lambda i: (i, 0, 0)),
            pl.BlockSpec((K, C_in, C_out_p), lambda i: (0, 0, 0)),
            pl.BlockSpec((1, C_out_p), lambda i: (0, 0)),
        ],
        out_specs=pl.BlockSpec((tb, L, C_out_p), lambda i: (i, 0, 0)),
        compiler_params=pltpu.CompilerParams(
            dimension_semantics=("parallel",)
        ),
        cost_estimate=cost,
    )(x_pad, w_kco, b_row)

    # strip batch / lane padding
    return out[:B, :, :C_out]


def conv_reference(x, weight, bias, *, pad_type="left"):
    """Pure-JAX reference matching torch Conv1d on permuted/padded input."""
    C_out, C_in, K = weight.shape
    L = x.shape[1]
    if pad_type == "left":
        pad_l, pad_r = K - 1, 0
    else:
        pad_l, pad_r = K // 2, (K - 1) // 2
    x_pad = jnp.pad(x, ((0, 0), (pad_l, pad_r), (0, 0)))
    out = jnp.zeros((x.shape[0], L, C_out), jnp.float32)
    for k in range(K):
        out = out + jnp.einsum(
            "blc,oc->blo", x_pad[:, k : k + L, :], weight[:, :, k]
        )
    return out + bias[None, None, :]


if __name__ == "__main__":
    # Module config: input_size=32, output_size=32, kernel_size=3, pad_type='left'
    B, L, C_in, C_out, K = 2, 8, 32, 32, 3

    key = jax.random.PRNGKey(0)
    kx, kw, kb = jax.random.split(key, 3)
    x = jax.random.normal(kx, (B, L, C_in), dtype=jnp.float32)

    # Deterministic parameter init (torch Conv1d-style uniform bound).
    bound = 1.0 / (C_in * K) ** 0.5
    weight = jax.random.uniform(kw, (C_out, C_in, K), jnp.float32, -bound, bound)
    bias = jax.random.uniform(kb, (C_out,), jnp.float32, -bound, bound)

    fwd_left = jax.jit(functools.partial(conv_forward, pad_type="left"))
    out = fwd_left(x, weight, bias)
    jax.block_until_ready(out)
    ref = conv_reference(x, weight, bias, pad_type="left")
    assert out.shape == (B, L, C_out)
    assert jnp.allclose(out, ref, atol=1e-5, rtol=1e-5)

    # Also exercise the 'both' padding mode of the module.
    fwd_both = jax.jit(functools.partial(conv_forward, pad_type="both"))
    out2 = fwd_both(x, weight, bias)
    jax.block_until_ready(out2)
    ref2 = conv_reference(x, weight, bias, pad_type="both")
    assert jnp.allclose(out2, ref2, atol=1e-5, rtol=1e-5)

    # TODO(synk): for production sizes, optionally cast x/weight to bf16 before
    # the pallas_call (keep the f32 accumulator) for v5e/v6e MXU peak throughput.
    print("KERNEL_OK")
</pallas_src>

<mosaic_0001>
module attributes {stable_mosaic.version = 11 : i64} {
  func.func @_conv_kernel(%arg0: i32, %arg1: memref<2x10x32xf32, #tpu.memory_space<vmem>>, %arg2: memref<3x32x128xf32, #tpu.memory_space<vmem>>, %arg3: memref<1x128xf32, #tpu.memory_space<vmem>>, %arg4: memref<2x8x128xf32, #tpu.memory_space<vmem>>) attributes {dimension_semantics = [#tpu.dimension_semantics<parallel>], iteration_bounds = array<i64: 1>, scalar_prefetch = 0 : i64, scratch_operands = 0 : i64, tpu.core_type = #tpu.core_type<tc>, window_params = [{transform_indices = @transform_0, window_bounds = array<i64: 2, 10, 32>}, {pipeline_mode = #tpu.pipeline_mode<synchronous>, transform_indices = @transform_1, window_bounds = array<i64: 3, 32, 128>}, {pipeline_mode = #tpu.pipeline_mode<synchronous>, transform_indices = @transform_2, window_bounds = array<i64: 1, 128>}, {transform_indices = @transform_3, window_bounds = array<i64: 2, 8, 128>}]} {
    %c0 = arith.constant 0 : index
    %c0_0 = arith.constant 0 : index
    %0 = vector.load %arg3[%c0, %c0_0] : memref<1x128xf32, #tpu.memory_space<vmem>>, vector<1x128xf32>
    %c0_1 = arith.constant 0 : index
    %c0_2 = arith.constant 0 : index
    %c0_3 = arith.constant 0 : index
    %1 = vector.load %arg2[%c0_1, %c0_2, %c0_3] : memref<3x32x128xf32, #tpu.memory_space<vmem>>, vector<1x32x128xf32>
    %2 = vector.shape_cast %1 : vector<1x32x128xf32> to vector<32x128xf32>
    %c1 = arith.constant 1 : index
    %c0_4 = arith.constant 0 : index
    %c0_5 = arith.constant 0 : index
    %3 = vector.load %arg2[%c1, %c0_4, %c0_5] : memref<3x32x128xf32, #tpu.memory_space<vmem>>, vector<1x32x128xf32>
    %4 = vector.shape_cast %3 : vector<1x32x128xf32> to vector<32x128xf32>
    %c2 = arith.constant 2 : index
    %c0_6 = arith.constant 0 : index
    %c0_7 = arith.constant 0 : index
    %5 = vector.load %arg2[%c2, %c0_6, %c0_7] : memref<3x32x128xf32, #tpu.memory_space<vmem>>, vector<1x32x128xf32>
    %6 = vector.shape_cast %5 : vector<1x32x128xf32> to vector<32x128xf32>
    %c0_8 = arith.constant 0 : index
    %c0_9 = arith.constant 0 : index
    %c0_10 = arith.constant 0 : index
    %7 = vector.load %arg1[%c0_8, %c0_9, %c0_10] : memref<2x10x32xf32, #tpu.memory_space<vmem>>, vector<1x10x32xf32>
    %8 = vector.shape_cast %7 : vector<1x10x32xf32> to vector<10x32xf32>
    %9 = vector.extract_strided_slice %8 {offsets = [0, 0], sizes = [8, 32], strides = [1, 1]} : vector<10x32xf32> to vector<8x32xf32>
    %cst = arith.constant dense<0.000000e+00> : vector<8x128xf32>
    %10 = tpu.matmul %9, %2, %cst {dimension_numbers = #tpu.dot_dimension_numbers<[1], [0], [0], [1], [0, 0, 1, 1], [], []>} : vector<8x32xf32>, vector<32x128xf32>, vector<8x128xf32> -> vector<8x128xf32>
    %11 = vector.extract_strided_slice %8 {offsets = [1, 0], sizes = [8, 32], strides = [1, 1]} : vector<10x32xf32> to vector<8x32xf32>
    %cst_11 = arith.constant dense<0.000000e+00> : vector<8x128xf32>
    %12 = tpu.matmul %11, %4, %cst_11 {dimension_numbers = #tpu.dot_dimension_numbers<[1], [0], [0], [1], [0, 0, 1, 1], [], []>} : vector<8x32xf32>, vector<32x128xf32>, vector<8x128xf32> -> vector<8x128xf32>
    %13 = arith.addf %10, %12 : vector<8x128xf32>
    %14 = vector.extract_strided_slice %8 {offsets = [2, 0], sizes = [8, 32], strides = [1, 1]} : vector<10x32xf32> to vector<8x32xf32>
    %cst_12 = arith.constant dense<0.000000e+00> : vector<8x128xf32>
    %15 = tpu.matmul %14, %6, %cst_12 {dimension_numbers = #tpu.dot_dimension_numbers<[1], [0], [0], [1], [0, 0, 1, 1], [], []>} : vector<8x32xf32>, vector<32x128xf32>, vector<8x128xf32> -> vector<8x128xf32>
    %16 = arith.addf %13, %15 : vector<8x128xf32>
    %17 = vector.broadcast %0 : vector<1x128xf32> to vector<8x128xf32>
    %18 = arith.addf %16, %17 : vector<8x128xf32>
    %c0_13 = arith.constant 0 : index
    %c0_14 = arith.constant 0 : index
    %c0_15 = arith.constant 0 : index
    %19 = vector.load %arg4[%c0_13, %c0_14, %c0_15] : memref<2x8x128xf32, #tpu.memory_space<vmem>>, vector<1x8x128xf32>
    %20 = vector.shape_cast %19 : vector<1x8x128xf32> to vector<8x128xf32>
    %21 = vector.shape_cast %18 : vector<8x128xf32> to vector<1x8x128xf32>
    tpu.vector_store %arg4[%c0_13, %c0_14, %c0_15], %21 {strides = array<i32>} : memref<2x8x128xf32, #tpu.memory_space<vmem>>, vector<1x8x128xf32>,
    %c1_16 = arith.constant 1 : index
    %c0_17 = arith.constant 0 : index
    %c0_18 = arith.constant 0 : index
    %22 = vector.load %arg1[%c1_16, %c0_17, %c0_18] : memref<2x10x32xf32, #tpu.memory_space<vmem>>, vector<1x10x32xf32>
    %23 = vector.shape_cast %22 : vector<1x10x32xf32> to vector<10x32xf32>
    %24 = vector.extract_strided_slice %23 {offsets = [0, 0], sizes = [8, 32], strides = [1, 1]} : vector<10x32xf32> to vector<8x32xf32>
    %cst_19 = arith.constant dense<0.000000e+00> : vector<8x128xf32>
    %25 = tpu.matmul %24, %2, %cst_19 {dimension_numbers = #tpu.dot_dimension_numbers<[1], [0], [0], [1], [0, 0, 1, 1], [], []>} : vector<8x32xf32>, vector<32x128xf32>, vector<8x128xf32> -> vector<8x128xf32>
    %26 = vector.extract_strided_slice %23 {offsets = [1, 0], sizes = [8, 32], strides = [1, 1]} : vector<10x32xf32> to vector<8x32xf32>
    %cst_20 = arith.constant dense<0.000000e+00> : vector<8x128xf32>
    %27 = tpu.matmul %26, %4, %cst_20 {dimension_numbers = #tpu.dot_dimension_numbers<[1], [0], [0], [1], [0, 0, 1, 1], [], []>} : vector<8x32xf32>, vector<32x128xf32>, vector<8x128xf32> -> vector<8x128xf32>
    %28 = arith.addf %25, %27 : vector<8x128xf32>
    %29 = vector.extract_strided_slice %23 {offsets = [2, 0], sizes = [8, 32], strides = [1, 1]} : vector<10x32xf32> to vector<8x32xf32>
    %cst_21 = arith.constant dense<0.000000e+00> : vector<8x128xf32>
    %30 = tpu.matmul %29, %6, %cst_21 {dimension_numbers = #tpu.dot_dimension_numbers<[1], [0], [0], [1], [0, 0, 1, 1], [], []>} : vector<8x32xf32>, vector<32x128xf32>, vector<8x128xf32> -> vector<8x128xf32>
    %31 = arith.addf %28, %30 : vector<8x128xf32>
    %32 = vector.broadcast %0 : vector<1x128xf32> to vector<8x128xf32>
    %33 = arith.addf %31, %32 : vector<8x128xf32>
    %c1_22 = arith.constant 1 : index
    %c0_23 = arith.constant 0 : index
    %c0_24 = arith.constant 0 : index
    %34 = vector.load %arg4[%c1_22, %c0_23, %c0_24] : memref<2x8x128xf32, #tpu.memory_space<vmem>>, vector<1x8x128xf32>
    %35 = vector.shape_cast %34 : vector<1x8x128xf32> to vector<8x128xf32>
    %36 = vector.shape_cast %33 : vector<8x128xf32> to vector<1x8x128xf32>
    tpu.vector_store %arg4[%c1_22, %c0_23, %c0_24], %36 {strides = array<i32>} : memref<2x8x128xf32, #tpu.memory_space<vmem>>, vector<1x8x128xf32>,
    return
  }
  func.func @transform_0(%arg0: i32) -> (i32, i32, i32) {
    %c0_i32 = arith.constant 0 : i32
    %c0_i32_0 = arith.constant 0 : i32
    %c0_i32_1 = arith.constant 0 : i32
    return %arg0, %c0_i32, %c0_i32_0 : i32, i32, i32
  }
  func.func @transform_1(%arg0: i32) -> (i32, i32, i32) {
    %c0_i32 = arith.constant 0 : i32
    %c0_i32_0 = arith.constant 0 : i32
    %c0_i32_1 = arith.constant 0 : i32
    %c0_i32_2 = arith.constant 0 : i32
    return %c0_i32, %c0_i32_0, %c0_i32_1 : i32, i32, i32
  }
  func.func @transform_2(%arg0: i32) -> (i32, i32) {
    %c0_i32 = arith.constant 0 : i32
    %c0_i32_0 = arith.constant 0 : i32
    %c0_i32_1 = arith.constant 0 : i32
    return %c0_i32, %c0_i32_0 : i32, i32
  }
  func.func @transform_3(%arg0: i32) -> (i32, i32, i32) {
    %c0_i32 = arith.constant 0 : i32
    %c0_i32_0 = arith.constant 0 : i32
    %c0_i32_1 = arith.constant 0 : i32
    return %arg0, %c0_i32, %c0_i32_0 : i32, i32, i32
  }
}

</mosaic_0001>

<llo_original>
// kernel: conv_forward.1
$region0: #{conv_forward.1}
  #allocation0 [shape = 'u32[]', space=smem, size = 0x4, offset = 0x4, fixed_abs, tag = 'smem constant byte address 0x4 - core index']
  #allocation1 [shape = 'u32[72,128]{1,0:T(1,128)}', space=vmem, size = 0x9000, scoped, tag = 'internal scratch']
  %s0 = inlined_call_operand.vmem [shape: f32[2,10,32], index: 0, kind: input, shape index: {}]
  %s1 = inlined_call_operand.vmem [shape: f32[3,32,128], index: 1, kind: input, shape index: {}]
  %s2 = inlined_call_operand.vmem [shape: f32[1,128], index: 2, kind: input, shape index: {}]
  %s3 = inlined_call_operand.hbm [shape: f32[2,8,128], index: 3, kind: output, shape index: {}]
  %s4 = sld [smem:[#allocation0]]
  $region22: #{conv_forward.1} parent=0
    _
  %s6 = ssub.s32 1, %s4
  %s7 = scalar_select 0, %s6, %s4
  $region1: #{conv_forward.1} parent=0
    #allocation2 [shape = 'u8[8192]{0}', space=vmem, size = 0x2000, scoped, tag = 'output window, operand 0, single buffered']
    #allocation3 [shape = 's32[1]{0}', space=sflag, size = 0x4, scoped, tag = 'scoped memory for conv_forward.1']
    %8 = vsyncpa [#allocation3], 0
    // Predicated region
    $region2: #{conv_forward.1} parent=1 // pred_check
      _
    $region3: #{conv_forward.1} parent=1 // pred_check_branch
      %10 = sbr.rel (0) target = $region5
    $region4: #{conv_forward.1} parent=1 // pred_region
      _
    $region5: #{conv_forward.1} parent=1 // pred_fallthru
      _
    // Predicated region
    $region6: #{conv_forward.1} parent=1 // pred_check
      _
    $region7: #{conv_forward.1} parent=1 // pred_check_branch
      %12 = sbr.rel (0) target = $region9
    $region8: #{conv_forward.1} parent=1 // pred_region
      _
    $region9: #{conv_forward.1} parent=1 // pred_fallthru
      _
    // Predicated region
    $region10: #{conv_forward.1} parent=1 // pred_check
      _
    $region11: #{conv_forward.1} parent=1 // pred_check_branch
      %14 = sbr.rel (0) target = $region13
    $region12: #{conv_forward.1} parent=1 // pred_region
      _
    $region13: #{conv_forward.1} parent=1 // pred_fallthru
      _
    %v15 = vld [vmem:[%s2] sm:$0x1]
    %v16 = vld [vmem:[%s1] sm:$0xff]
    %v17 = vld [vmem:[%s1 + $0x8] sm:$0xff]
    %v18 = vld [vmem:[%s1 + $0x10] sm:$0xff]
    %v19 = vld [vmem:[%s1 + $0x18] sm:$0xff]
    %s20 = scalar_lea.vmem %s1, 32
    %v21 = vld [vmem:[%s20] sm:$0xff]
    %v22 = vld [vmem:[%s20 + $0x8] sm:$0xff]
    %v23 = vld [vmem:[%s20 + $0x10] sm:$0xff]
    %v24 = vld [vmem:[%s20 + $0x18] sm:$0xff]
    %s25 = scalar_lea.vmem %s1, 64
    %v26 = vld [vmem:[%s25] sm:$0xff]
    %v27 = vld [vmem:[%s25 + $0x8] sm:$0xff]
    %v28 = vld [vmem:[%s25 + $0x10] sm:$0xff]
    %v29 = vld [vmem:[%s25 + $0x18] sm:$0xff]
    %v30 = vld [vmem:[%s0] sm:$0xff]
    %v31 = vld [vmem:[%s0 + $0x8] sm:$0x3]
    %vm34 = vcmask 1046528
    %v35 = vrot.slane %v30, 1
    %v36 = vrot.slane %v31, 1
    %v37 = vsel %vm34, %v35, %v36
    %vm38 = vcmask 261120
    %v39 = vsel %vm38, %v37, 0
    %41 = vmatpush.msra.mxu0 0.0
    %42 = vmatpush.msra.mxu0 0.0
    %43 = vmatpush.msra.mxu0 0.0
    %44 = vmatpush.msra.mxu0 0.0
    %45 = vmatpush.msra.mxu0 0.0
    %46 = vmatpush.msra.mxu0 0.0
    %47 = vmatpush.msra.mxu0 0.0
    %48 = vmatpush.msra.mxu0 0.0
    %49 = vmatpush.msra.mxu0 0.0
    %50 = vmatpush.msra.mxu0 0.0
    %51 = vmatpush.msra.mxu0 0.0
    %52 = vmatpush.msra.mxu0 0.0
    %53 = vmatpush.msra.mxu0 %v24
    %54 = vmatpush.msra.mxu0 %v23
    %55 = vmatpush.msra.mxu0 %v22
    %56 = vmatpush.msra.mxu0 %v21
    %57 = vmatmul.f32.gmra.mxu0 %v39
    %v58 = vpop.f32.mrf.mxu0
    %v59 = vadd.f32 0.0, %v58
    %60 = vdwg.mxu0
    %v61 = vsel %vm38, %v30, 0
    %63 = vmatpush.msra.mxu0 0.0
    %64 = vmatpush.msra.mxu0 0.0
    %65 = vmatpush.msra.mxu0 0.0
    %66 = vmatpush.msra.mxu0 0.0
    %67 = vmatpush.msra.mxu0 0.0
    %68 = vmatpush.msra.mxu0 0.0
    %69 = vmatpush.msra.mxu0 0.0
    %70 = vmatpush.msra.mxu0 0.0
    %71 = vmatpush.msra.mxu0 0.0
    %72 = vmatpush.msra.mxu0 0.0
    %73 = vmatpush.msra.mxu0 0.0
    %74 = vmatpush.msra.mxu0 0.0
    %75 = vmatpush.msra.mxu0 %v19
    %76 = vmatpush.msra.mxu0 %v18
    %77 = vmatpush.msra.mxu0 %v17
    %78 = vmatpush.msra.mxu0 %v16
    %79 = vmatmul.f32.gmra.mxu0 %v61
    %v80 = vpop.f32.mrf.mxu0
    %v81 = vadd.f32 %v59, %v80
    %82 = vdwg.mxu0
    %vm83 = vcmask 1045504
    %v84 = vrot.slane %v30, 2
    %v85 = vrot.slane %v31, 2
    %v86 = vsel %vm83, %v84, %v85
    %v87 = vsel %vm38, %v86, 0
    %89 = vmatpush.msra.mxu0 0.0
    %90 = vmatpush.msra.mxu0 0.0
    %91 = vmatpush.msra.mxu0 0.0
    %92 = vmatpush.msra.mxu0 0.0
    %93 = vmatpush.msra.mxu0 0.0
    %94 = vmatpush.msra.mxu0 0.0
    %95 = vmatpush.msra.mxu0 0.0
    %96 = vmatpush.msra.mxu0 0.0
    %97 = vmatpush.msra.mxu0 0.0
    %98 = vmatpush.msra.mxu0 0.0
    %99 = vmatpush.msra.mxu0 0.0
    %100 = vmatpush.msra.mxu0 0.0
    %101 = vmatpush.msra.mxu0 %v29
    %102 = vmatpush.msra.mxu0 %v28
    %103 = vmatpush.msra.mxu0 %v27
    %104 = vmatpush.msra.mxu0 %v26
    %105 = vmatmul.f32.gmra.mxu0 %v87
    %v106 = vpop.f32.mrf.mxu0
    %v107 = vadd.f32 0.0, %v106
    %108 = vdwg.mxu0
    %v109 = vadd.f32 %v81, %v107
    %v111 = vperm.slane %v15, 0
    %v113 = vadd.f32 %v109, %v111
    %114 = vst [vmem:[#allocation2] sm:$0xff] %v113
    %s115 = scalar_lea.vmem %s0, 16
    %v116 = vld [vmem:[%s115] sm:$0xff]
    %v117 = vld [vmem:[%s115 + $0x8] sm:$0x3]
    %v120 = vrot.slane %v116, 1
    %v121 = vrot.slane %v117, 1
    %v122 = vsel %vm34, %v120, %v121
    %v123 = vsel %vm38, %v122, 0
    %125 = vmatpush.msra.mxu0 0.0
    %126 = vmatpush.msra.mxu0 0.0
    %127 = vmatpush.msra.mxu0 0.0
    %128 = vmatpush.msra.mxu0 0.0
    %129 = vmatpush.msra.mxu0 0.0
    %130 = vmatpush.msra.mxu0 0.0
    %131 = vmatpush.msra.mxu0 0.0
    %132 = vmatpush.msra.mxu0 0.0
    %133 = vmatpush.msra.mxu0 0.0
    %134 = vmatpush.msra.mxu0 0.0
    %135 = vmatpush.msra.mxu0 0.0
    %136 = vmatpush.msra.mxu0 0.0
    %137 = vmatpush.msra.mxu0 %v24
    %138 = vmatpush.msra.mxu0 %v23
    %139 = vmatpush.msra.mxu0 %v22
    %140 = vmatpush.msra.mxu0 %v21
    %141 = vmatmul.f32.gmra.mxu0 %v123
    %v142 = vpop.f32.mrf.mxu0
    %v143 = vadd.f32 0.0, %v142
    %144 = vdwg.mxu0
    %v145 = vsel %vm38, %v116, 0
    %147 = vmatpush.msra.mxu0 0.0
    %148 = vmatpush.msra.mxu0 0.0
    %149 = vmatpush.msra.mxu0 0.0
    %150 = vmatpush.msra.mxu0 0.0
    %151 = vmatpush.msra.mxu0 0.0
    %152 = vmatpush.msra.mxu0 0.0
    %153 = vmatpush.msra.mxu0 0.0
    %154 = vmatpush.msra.mxu0 0.0
    %155 = vmatpush.msra.mxu0 0.0
    %156 = vmatpush.msra.mxu0 0.0
    %157 = vmatpush.msra.mxu0 0.0
    %158 = vmatpush.msra.mxu0 0.0
    %159 = vmatpush.msra.mxu0 %v19
    %160 = vmatpush.msra.mxu0 %v18
    %161 = vmatpush.msra.mxu0 %v17
    %162 = vmatpush.msra.mxu0 %v16
    %163 = vmatmul.f32.gmra.mxu0 %v145
    %v164 = vpop.f32.mrf.mxu0
    %v165 = vadd.f32 %v143, %v164
    %166 = vdwg.mxu0
    %v167 = vrot.slane %v116, 2
    %v168 = vrot.slane %v117, 2
    %v169 = vsel %vm83, %v167, %v168
    %v170 = vsel %vm38, %v169, 0
    %172 = vmatpush.msra.mxu0 0.0
    %173 = vmatpush.msra.mxu0 0.0
    %174 = vmatpush.msra.mxu0 0.0
    %175 = vmatpush.msra.mxu0 0.0
    %176 = vmatpush.msra.mxu0 0.0
    %177 = vmatpush.msra.mxu0 0.0
    %178 = vmatpush.msra.mxu0 0.0
    %179 = vmatpush.msra.mxu0 0.0
    %180 = vmatpush.msra.mxu0 0.0
    %181 = vmatpush.msra.mxu0 0.0
    %182 = vmatpush.msra.mxu0 0.0
    %183 = vmatpush.msra.mxu0 0.0
    %184 = vmatpush.msra.mxu0 %v29
    %185 = vmatpush.msra.mxu0 %v28
    %186 = vmatpush.msra.mxu0 %v27
    %187 = vmatpush.msra.mxu0 %v26
    %188 = vmatmul.f32.gmra.mxu0 %v170
    %v189 = vpop.f32.mrf.mxu0
    %v190 = vadd.f32 0.0, %v189
    %191 = vdwg.mxu0
    %v192 = vadd.f32 %v165, %v190
    %v193 = vadd.f32 %v192, %v111
    %s194 = scalar_lea.vmem [#allocation2], 8
    %195 = vst [vmem:[%s194] sm:$0xff] %v193
    // Predicated region
    $region14: #{conv_forward.1} parent=1 // pred_check
      _
    $region15: #{conv_forward.1} parent=1 // pred_check_branch
      %197 = sbr.rel (0) target = $region17
    $region16: #{conv_forward.1} parent=1 // pred_region
      %199 = vsyncadd [#allocation3], 0
      %s200 = sshll.u32 [#allocation2], 4
      %s201 = int_to_ptr.vmem [resolvable:$true] %s200
      %s202 = sshll.u32 %s3, 4
      %s203 = int_to_ptr.hbm [resolvable:$true] %s202
      %208 = dma.vmem_to_hbm [thread:$0]  %s201, 256, %s203, [#allocation3], 128, 128, 8
    $region17: #{conv_forward.1} parent=1 // pred_fallthru
      _
    // Predicated region
    $region18: #{conv_forward.1} parent=1 // pred_check
      _
    $region19: #{conv_forward.1} parent=1 // pred_check_branch
      %210 = sbr.rel (0) target = $region21
    $region20: #{conv_forward.1} parent=1 // pred_region
      %212 = dma.done [#allocation3], 256
    $region21: #{conv_forward.1} parent=1 // pred_fallthru
      _
    %213 = vsyncpa [#allocation3], 1

</llo_original>
